<compile_context>
chip_gen: v7x
topology: tpu7x:2x2x1
jax: 0.10.0
libtpu: 0.0.40
codegen_flags: <defaults>
</compile_context>

<pallas_src>
import functools

import jax
import jax.numpy as jnp
from jax.experimental import pallas as pl
from jax.experimental.pallas import tpu as pltpu

BN_EPS = 1e-5
LANE = 128
M_TILE = 256                      # rows per grid step (multiple of 8/16 sublanes)
MXU_DTYPE = jnp.bfloat16          # MXU input dtype; accumulation stays f32
VMEM_LIMIT = 48 * 1024 * 1024     # safe on v5e/v6e (128 MiB) and v7x (64 MiB)


def _round_up(x, m):
    return (x + m - 1) // m * m


# -----------------------------------------------------------------------------
# Pass 1 kernel: conv-as-matmul + per-tile batch-norm statistics
# (optionally also accumulates the 1x1-shortcut conv's statistics)
# -----------------------------------------------------------------------------
def _matmul_stats_kernel(*refs, with_conv_shortcut: bool):
    if with_conv_shortcut:
        p_ref, w_ref, xs_ref, ws_ref, y_ref, st_ref = refs
    else:
        p_ref, w_ref, y_ref, st_ref = refs

    # MXU matmul: bf16 x bf16 -> f32 accumulator
    y = jnp.dot(p_ref[...], w_ref[...], preferred_element_type=jnp.float32)
    y_ref[...] = y

    rows = [jnp.sum(y, axis=0, keepdims=True),
            jnp.sum(y * y, axis=0, keepdims=True)]
    if with_conv_shortcut:
        s = jnp.dot(xs_ref[...], ws_ref[...], preferred_element_type=jnp.float32)
        rows.append(jnp.sum(s, axis=0, keepdims=True))
        rows.append(jnp.sum(s * s, axis=0, keepdims=True))
    st_ref[0, :, :] = jnp.concatenate(rows, axis=0)


# -----------------------------------------------------------------------------
# Pass 2 kernel: y*scale + shift (+ shortcut) (+ ReLU)
# shortcut == "conv": recompute tiny 1x1 matmul in-tile and apply its BN
# shortcut == "identity": add the residual tile directly
# -----------------------------------------------------------------------------
def _bn_apply_kernel(*refs, shortcut: str, apply_relu: bool):
    if shortcut == "conv":
        y_ref, sc_ref, sh_ref, xs_ref, ws_ref, ssc_ref, ssh_ref, o_ref = refs
    elif shortcut == "identity":
        y_ref, sc_ref, sh_ref, r_ref, o_ref = refs
    else:
        y_ref, sc_ref, sh_ref, o_ref = refs

    out = y_ref[...] * sc_ref[...] + sh_ref[...]
    if shortcut == "conv":
        s = jnp.dot(xs_ref[...], ws_ref[...], preferred_element_type=jnp.float32)
        out = out + (s * ssc_ref[...] + ssh_ref[...])
    elif shortcut == "identity":
        out = out + r_ref[...]
    if apply_relu:
        out = jnp.maximum(out, 0.0)
    o_ref[...] = out.astype(o_ref.dtype)


# -----------------------------------------------------------------------------
# Wrapper: two-pass fused conv + batchnorm (+ fused shortcut) (+ ReLU)
# -----------------------------------------------------------------------------
def _finalize_bn(s, sq, count, gamma_p, beta_p):
    """Per-channel (Cp,) finalize: scale = g*rsqrt(var+eps), shift = b - mean*scale."""
    mean = s / count
    var = jnp.maximum(sq / count - mean * mean, 0.0)
    scale = gamma_p * jax.lax.rsqrt(var + BN_EPS)
    shift = beta_p - mean * scale
    return scale.reshape(1, -1), shift.reshape(1, -1)


def fused_conv_bn(patches, w_pad, gamma, beta, *, cout, apply_relu,
                  shortcut=None, m_tile=M_TILE):
    """
    patches : (M, K) f32 im2col rows of the 3x3 conv
    w_pad   : (K, Cp) MXU-dtype weight, Cp = round_up(cout, 128) (zero-padded)
    shortcut: None
              ("identity", res)  with res (M, cout) f32
              ("conv", xs, ws_pad, gs, bs) with xs (M, Cin) f32, ws_pad (Cin, Cp)
    Returns (M, cout) f32.
    """
    m, k = patches.shape
    cp = w_pad.shape[1]
    mp = _round_up(m, m_tile)
    nt = mp // m_tile

    sc_kind = "none" if shortcut is None else shortcut[0]
    with_cs = sc_kind == "conv"

    p_pad = jnp.pad(patches.astype(MXU_DTYPE), ((0, mp - m), (0, 0)))

    # ----- pass 1: matmul + partial stats -----
    in1 = [p_pad, w_pad]
    specs1 = [pl.BlockSpec((m_tile, k), lambda i: (i, 0)),
              pl.BlockSpec((k, cp), lambda i: (0, 0))]
    nstats = 2
    xs_pad = ws_pad = None
    cin_s = 0
    if with_cs:
        _, xs, ws_pad, gs, bs = shortcut
        cin_s = xs.shape[1]
        xs_pad = jnp.pad(xs.astype(MXU_DTYPE), ((0, mp - m), (0, 0)))
        in1 += [xs_pad, ws_pad]
        specs1 += [pl.BlockSpec((m_tile, cin_s), lambda i: (i, 0)),
                   pl.BlockSpec((cin_s, cp), lambda i: (0, 0))]
        nstats = 4

    flops1 = 2 * mp * k * cp + (2 * mp * cin_s * cp if with_cs else 0)
    bytes1 = (sum(int(a.size) * a.dtype.itemsize for a in in1)
              + mp * cp * 4 + nt * nstats * cp * 4)

    y_raw, pstats = pl.pallas_call(
        functools.partial(_matmul_stats_kernel, with_conv_shortcut=with_cs),
        grid=(nt,),
        in_specs=specs1,
        out_specs=[pl.BlockSpec((m_tile, cp), lambda i: (i, 0)),
                   pl.BlockSpec((1, nstats, cp), lambda i: (i, 0, 0))],
        out_shape=[jax.ShapeDtypeStruct((mp, cp), jnp.float32),
                   jax.ShapeDtypeStruct((nt, nstats, cp), jnp.float32)],
        compiler_params=pltpu.CompilerParams(
            dimension_semantics=("parallel",),
            vmem_limit_bytes=VMEM_LIMIT),
        cost_estimate=pl.CostEstimate(flops=flops1, transcendentals=0,
                                      bytes_accessed=bytes1),
    )(*in1)

    # Tiny per-channel finalize (Cp-length vectors) in plain JAX.
    stats = jnp.sum(pstats, axis=0)                       # (nstats, Cp)
    gamma_p = jnp.pad(gamma.astype(jnp.float32), (0, cp - cout))
    beta_p = jnp.pad(beta.astype(jnp.float32), (0, cp - cout))
    scale, shift = _finalize_bn(stats[0], stats[1], m, gamma_p, beta_p)

    # ----- pass 2: normalize + residual + relu -----
    in2 = [y_raw, scale, shift]
    specs2 = [pl.BlockSpec((m_tile, cp), lambda i: (i, 0)),
              pl.BlockSpec((1, cp), lambda i: (0, 0)),
              pl.BlockSpec((1, cp), lambda i: (0, 0))]
    if with_cs:
        gs_p = jnp.pad(gs.astype(jnp.float32), (0, cp - cout))
        bs_p = jnp.pad(bs.astype(jnp.float32), (0, cp - cout))
        s_scale, s_shift = _finalize_bn(stats[2], stats[3], m, gs_p, bs_p)
        in2 += [xs_pad, ws_pad, s_scale, s_shift]
        specs2 += [pl.BlockSpec((m_tile, cin_s), lambda i: (i, 0)),
                   pl.BlockSpec((cin_s, cp), lambda i: (0, 0)),
                   pl.BlockSpec((1, cp), lambda i: (0, 0)),
                   pl.BlockSpec((1, cp), lambda i: (0, 0))]
    elif sc_kind == "identity":
        res = shortcut[1]
        res_pad = jnp.pad(res.astype(jnp.float32),
                          ((0, mp - m), (0, cp - res.shape[1])))
        in2.append(res_pad)
        specs2.append(pl.BlockSpec((m_tile, cp), lambda i: (i, 0)))

    flops2 = 3 * mp * cp + (2 * mp * cin_s * cp if with_cs else 0)
    bytes2 = sum(int(a.size) * a.dtype.itemsize for a in in2) + mp * cp * 4

    out_pad = pl.pallas_call(
        functools.partial(_bn_apply_kernel, shortcut=sc_kind,
                          apply_relu=apply_relu),
        grid=(nt,),
        in_specs=specs2,
        out_specs=pl.BlockSpec((m_tile, cp), lambda i: (i, 0)),
        out_shape=jax.ShapeDtypeStruct((mp, cp), jnp.float32),
        compiler_params=pltpu.CompilerParams(
            dimension_semantics=("parallel",),
            vmem_limit_bytes=VMEM_LIMIT),
        cost_estimate=pl.CostEstimate(flops=flops2, transcendentals=0,
                                      bytes_accessed=bytes2),
    )(*in2)

    return out_pad[:m, :cout]


# -----------------------------------------------------------------------------
# Glue: im2col, weight layout, BasicBlock forward
# -----------------------------------------------------------------------------
def _im2col(x_nhwc, kh, kw, stride, pad):
    """(N,H,W,C) -> patches (N*Ho*Wo, kh*kw*C) plus output dims (N,Ho,Wo)."""
    n, h, w, c = x_nhwc.shape
    xp = jnp.pad(x_nhwc, ((0, 0), (pad, pad), (pad, pad), (0, 0)))
    ho = (h + 2 * pad - kh) // stride + 1
    wo = (w + 2 * pad - kw) // stride + 1
    cols = []
    for i in range(kh):
        for j in range(kw):
            cols.append(xp[:, i:i + stride * ho:stride, j:j + stride * wo:stride, :])
    patches = jnp.concatenate(cols, axis=-1)               # (N, Ho, Wo, kh*kw*C)
    return patches.reshape(n * ho * wo, kh * kw * c), (n, ho, wo)


def _weight_to_matrix(w_oihw, cp, dtype):
    """(Cout,Cin,kh,kw) -> (kh*kw*Cin, Cp) matching im2col tap/channel order,
    channel-padded to Cp lanes, cast to the MXU dtype."""
    cout, cin, kh, kw = w_oihw.shape
    wm = jnp.transpose(w_oihw, (2, 3, 1, 0)).reshape(kh * kw * cin, cout)
    return jnp.pad(wm, ((0, 0), (0, cp - cout))).astype(dtype)


class BasicBlockPallas:
    expansion = 1

    def __init__(self, in_planes, planes, stride=1, key=None):
        if key is None:
            key = jax.random.PRNGKey(0)
        self.in_planes = in_planes
        self.planes = planes
        self.stride = stride
        self.cp = _round_up(self.expansion * planes, LANE)
        k1, k2, k3, k4, k5 = jax.random.split(key, 5)

        # conv3x3 weights (Cout, Cin, 3, 3), no bias (kept in OIHW for reference)
        self.w1 = 0.1 * jax.random.normal(k1, (planes, in_planes, 3, 3), jnp.float32)
        self.w2 = 0.1 * jax.random.normal(k2, (planes, planes, 3, 3), jnp.float32)
        # BN affine params (randomized a bit so the affine path is exercised)
        self.g1 = 1.0 + 0.1 * jax.random.normal(k4, (planes,), jnp.float32)
        self.b1 = 0.1 * jax.random.normal(k5, (planes,), jnp.float32)
        self.g2 = jnp.ones((planes,), jnp.float32)
        self.b2 = jnp.zeros((planes,), jnp.float32)

        # hoisted matmul-layout weights (padded, MXU dtype), computed once
        self.w1m = _weight_to_matrix(self.w1, self.cp, MXU_DTYPE)
        self.w2m = _weight_to_matrix(self.w2, self.cp, MXU_DTYPE)

        self.has_shortcut = (stride != 1) or (in_planes != self.expansion * planes)
        if self.has_shortcut:
            self.ws = 0.1 * jax.random.normal(
                k3, (self.expansion * planes, in_planes, 1, 1), jnp.float32)
            self.gs = jnp.ones((self.expansion * planes,), jnp.float32)
            self.bs = jnp.zeros((self.expansion * planes,), jnp.float32)
            self.wsm = _weight_to_matrix(self.ws, self.cp, MXU_DTYPE)   # (Cin, Cp)

    def __call__(self, x_nchw, mask=None):
        # TODO(synk): mask=None path only (see header).
        x = jnp.transpose(x_nchw, (0, 2, 3, 1)).astype(jnp.float32)     # NHWC
        n = x.shape[0]

        # --- conv1 -> bn1 -> relu (two fused Pallas passes) ---
        p1, (_, ho, wo) = _im2col(x, 3, 3, self.stride, 1)
        out1 = fused_conv_bn(p1, self.w1m, self.g1, self.b1,
                             cout=self.planes, apply_relu=True)
        out1_nhwc = out1.reshape(n, ho, wo, self.planes)

        m = n * ho * wo
        if self.has_shortcut:
            xs = x[:, ::self.stride, ::self.stride, :].reshape(m, self.in_planes)
            shortcut = ("conv", xs, self.wsm, self.gs, self.bs)
        else:
            shortcut = ("identity", x.reshape(m, self.planes))

        # --- conv2 -> bn2 -> (+fused shortcut conv/bn or identity) -> relu ---
        p2, _ = _im2col(out1_nhwc, 3, 3, 1, 1)
        out2 = fused_conv_bn(p2, self.w2m, self.g2, self.b2,
                             cout=self.planes, apply_relu=True,
                             shortcut=shortcut)
        return jnp.transpose(out2.reshape(n, ho, wo, self.planes), (0, 3, 1, 2))


# -----------------------------------------------------------------------------
# Pure-JAX reference (models the bf16 rounding of MXU inputs, f32 everywhere else)
# -----------------------------------------------------------------------------
def _ref_conv(x_nhwc, w_oihw, stride, pad):
    lhs = x_nhwc.astype(MXU_DTYPE).astype(jnp.float32)
    rhs = w_oihw.astype(MXU_DTYPE).astype(jnp.float32)
    return jax.lax.conv_general_dilated(
        lhs, rhs, (stride, stride), ((pad, pad), (pad, pad)),
        dimension_numbers=("NHWC", "OIHW", "NHWC"))


def _ref_bn(y, gamma, beta):
    mean = jnp.mean(y, axis=(0, 1, 2))
    var = jnp.mean(jnp.square(y - mean), axis=(0, 1, 2))
    return (y - mean) * jax.lax.rsqrt(var + BN_EPS) * gamma + beta


def _ref_forward(block, x_nchw):
    x = jnp.transpose(x_nchw, (0, 2, 3, 1)).astype(jnp.float32)
    o = jax.nn.relu(_ref_bn(_ref_conv(x, block.w1, block.stride, 1),
                            block.g1, block.b1))
    o = _ref_bn(_ref_conv(o, block.w2, 1, 1), block.g2, block.b2)
    if block.has_shortcut:
        s = _ref_bn(_ref_conv(x, block.ws, block.stride, 0), block.gs, block.bs)
    else:
        s = x
    o = jax.nn.relu(o + s)
    return jnp.transpose(o, (0, 3, 1, 2))


if __name__ == "__main__":
    key = jax.random.PRNGKey(0)
    kx1, kx2, kp1, kp2 = jax.random.split(key, 4)

    # Block A: stride-2 with 1x1-conv shortcut.  x (2,4,16,16) -> (2,8,8,8)
    xA = jax.random.normal(kx1, (2, 4, 16, 16), jnp.float32)
    blockA = BasicBlockPallas(in_planes=4, planes=8, stride=2, key=kp1)
    outA = jax.block_until_ready(blockA(xA))
    refA = jax.block_until_ready(_ref_forward(blockA, xA))
    assert outA.shape == (2, 8, 8, 8), outA.shape
    errA = float(jnp.max(jnp.abs(outA - refA)))
    assert errA < 5e-3, errA

    # Block B: stride-1 identity shortcut; M=512 -> 2 grid tiles (cross-tile stats).
    xB = jax.random.normal(kx2, (2, 8, 16, 16), jnp.float32)
    blockB = BasicBlockPallas(in_planes=8, planes=8, stride=1, key=kp2)
    outB = jax.block_until_ready(blockB(xB))
    refB = jax.block_until_ready(_ref_forward(blockB, xB))
    assert outB.shape == (2, 8, 16, 16), outB.shape
    errB = float(jnp.max(jnp.abs(outB - refB)))
    assert errB < 5e-3, errB

    print("KERNEL_OK")
</pallas_src>

<mosaic_0001>
module attributes {stable_mosaic.version = 11 : i64} {
  func.func @_matmul_stats_kernel(%arg0: i32, %arg1: memref<256x36xbf16, #tpu.memory_space<vmem>>, %arg2: memref<36x128xbf16, #tpu.memory_space<vmem>>, %arg3: memref<256x128xf32, #tpu.memory_space<vmem>>, %arg4: memref<1x2x128xf32, #tpu.memory_space<vmem>>) attributes {dimension_semantics = [#tpu.dimension_semantics<parallel>], iteration_bounds = array<i64: 1>, scalar_prefetch = 0 : i64, scratch_operands = 0 : i64, tpu.core_type = #tpu.core_type<tc>, window_params = [{transform_indices = @transform_0, window_bounds = array<i64: 256, 36>}, {pipeline_mode = #tpu.pipeline_mode<synchronous>, transform_indices = @transform_1, window_bounds = array<i64: 36, 128>}, {transform_indices = @transform_2, window_bounds = array<i64: 256, 128>}, {transform_indices = @transform_3, window_bounds = array<i64: 1, 2, 128>}]} {
    %c0 = arith.constant 0 : index
    %c0_0 = arith.constant 0 : index
    %0 = vector.load %arg1[%c0, %c0_0] : memref<256x36xbf16, #tpu.memory_space<vmem>>, vector<256x36xbf16>
    %c0_1 = arith.constant 0 : index
    %c0_2 = arith.constant 0 : index
    %1 = vector.load %arg2[%c0_1, %c0_2] : memref<36x128xbf16, #tpu.memory_space<vmem>>, vector<36x128xbf16>
    %cst = arith.constant dense<0.000000e+00> : vector<256x128xf32>
    %2 = tpu.matmul %0, %1, %cst {dimension_numbers = #tpu.dot_dimension_numbers<[1], [0], [0], [1], [0, 0, 1, 1], [], []>} : vector<256x36xbf16>, vector<36x128xbf16>, vector<256x128xf32> -> vector<256x128xf32>
    %c0_3 = arith.constant 0 : index
    %c0_4 = arith.constant 0 : index
    %3 = vector.load %arg3[%c0_3, %c0_4] : memref<256x128xf32, #tpu.memory_space<vmem>>, vector<256x128xf32>
    tpu.vector_store %arg3[%c0_3, %c0_4], %2 {strides = array<i32>} : memref<256x128xf32, #tpu.memory_space<vmem>>, vector<256x128xf32>,
    %cst_5 = arith.constant dense<0.000000e+00> : vector<128xf32>
    %4 = vector.multi_reduction <add>, %2, %cst_5 [0] : vector<256x128xf32> to vector<128xf32>
    %5 = vector.shape_cast %4 : vector<128xf32> to vector<1x128xf32>
    %6 = arith.mulf %2, %2 : vector<256x128xf32>
    %cst_6 = arith.constant dense<0.000000e+00> : vector<128xf32>
    %7 = vector.multi_reduction <add>, %6, %cst_6 [0] : vector<256x128xf32> to vector<128xf32>
    %8 = vector.shape_cast %7 : vector<128xf32> to vector<1x128xf32>
    %9 = tpu.concatenate %5, %8 in 0 : vector<1x128xf32>, vector<1x128xf32> -> vector<2x128xf32>
    %c0_7 = arith.constant 0 : index
    %c0_8 = arith.constant 0 : index
    %c0_9 = arith.constant 0 : index
    %10 = vector.load %arg4[%c0_7, %c0_8, %c0_9] : memref<1x2x128xf32, #tpu.memory_space<vmem>>, vector<1x2x128xf32>
    %11 = vector.shape_cast %10 : vector<1x2x128xf32> to vector<2x128xf32>
    %12 = vector.shape_cast %9 : vector<2x128xf32> to vector<1x2x128xf32>
    tpu.vector_store %arg4[%c0_7, %c0_8, %c0_9], %12 {strides = array<i32>} : memref<1x2x128xf32, #tpu.memory_space<vmem>>, vector<1x2x128xf32>,
    return
  }
  func.func @transform_0(%arg0: i32) -> (i32, i32) {
    %c0_i32 = arith.constant 0 : i32
    %c0_i32_0 = arith.constant 0 : i32
    return %arg0, %c0_i32 : i32, i32
  }
  func.func @transform_1(%arg0: i32) -> (i32, i32) {
    %c0_i32 = arith.constant 0 : i32
    %c0_i32_0 = arith.constant 0 : i32
    %c0_i32_1 = arith.constant 0 : i32
    return %c0_i32, %c0_i32_0 : i32, i32
  }
  func.func @transform_2(%arg0: i32) -> (i32, i32) {
    %c0_i32 = arith.constant 0 : i32
    %c0_i32_0 = arith.constant 0 : i32
    return %arg0, %c0_i32 : i32, i32
  }
  func.func @transform_3(%arg0: i32) -> (i32, i32, i32) {
    %c0_i32 = arith.constant 0 : i32
    %c0_i32_0 = arith.constant 0 : i32
    %c0_i32_1 = arith.constant 0 : i32
    return %arg0, %c0_i32, %c0_i32_0 : i32, i32, i32
  }
}

</mosaic_0001>

<llo_original>
// kernel: tpu_custom_call.1
$region0: #{tpu_custom_call.1}
  #allocation0 [shape = 'u32[]', space=smem, size = 0x4, offset = 0x4, fixed_abs, tag = 'smem constant byte address 0x4 - core index']
  #allocation1 [shape = 'u32[144,128]{1,0:T(1,128)}', space=vmem, size = 0x12000, scoped, tag = 'internal scratch']
  %s0 = inlined_call_operand.vmem [shape: bf16[256,36], index: 0, kind: input, shape index: {}]
  %s1 = inlined_call_operand.vmem [shape: bf16[36,128], index: 1, kind: input, shape index: {}]
  %s2 = inlined_call_operand.hbm [shape: f32[256,128], index: 2, kind: output, shape index: {0}]
  %s3 = inlined_call_operand.hbm [shape: f32[1,2,128], index: 3, kind: output, shape index: {1}]
  %4 = xla_tuple %s2, %s3
  %s5 = sld [smem:[#allocation0]]
  $region26: #{tpu_custom_call.1} parent=0
    _
  %s7 = ssub.s32 1, %s5
  %s8 = scalar_select 0, %s7, %s5
  $region1: #{tpu_custom_call.1} parent=0
    #allocation2 [shape = 'u8[131072]{0}', space=vmem, size = 0x20000, scoped, tag = 'output window, operand 0, single buffered']
    #allocation3 [shape = 's32[1]{0}', space=sflag, size = 0x4, scoped, tag = 'scoped memory for tpu_custom_call.1']
    #allocation4 [shape = 'u8[1024]{0}', space=vmem, size = 0x400, scoped, tag = 'output window, operand 1, single buffered']
    #allocation5 [shape = 's32[1]{0}', space=sflag, size = 0x4, scoped, tag = 'scoped memory for tpu_custom_call.1']
    %9 = vsyncpa [#allocation3], 0
    %10 = vsyncpa [#allocation5], 0
    // Predicated region
    $region2: #{tpu_custom_call.1} parent=1 // pred_check
      _
    $region3: #{tpu_custom_call.1} parent=1 // pred_check_branch
      %12 = sbr.rel (0) target = $region5
    $region4: #{tpu_custom_call.1} parent=1 // pred_region
      _
    $region5: #{tpu_custom_call.1} parent=1 // pred_fallthru
      _
    // Predicated region
    $region6: #{tpu_custom_call.1} parent=1 // pred_check
      _
    $region7: #{tpu_custom_call.1} parent=1 // pred_check_branch
      %14 = sbr.rel (0) target = $region9
    $region8: #{tpu_custom_call.1} parent=1 // pred_region
      _
    $region9: #{tpu_custom_call.1} parent=1 // pred_fallthru
      _
    %v16 = vld [vmem:[%s0] sm:$0xf]
    %v17 = vld [vmem:[%s0 + $0x4] sm:$0xf]
    %v18 = vld [vmem:[%s0 + $0x8] sm:$0xf]
    %v19 = vld [vmem:[%s0 + $0xc] sm:$0xf]
    %v20 = vld [vmem:[%s0 + $0x10] sm:$0xf]
    %v21 = vld [vmem:[%s0 + $0x14] sm:$0xf]
    %v22 = vld [vmem:[%s0 + $0x18] sm:$0xf]
    %v23 = vld [vmem:[%s0 + $0x1c] sm:$0xf]
    %v24 = vld [vmem:[%s0 + $0x20] sm:$0xf]
    %v25 = vld [vmem:[%s0 + $0x24] sm:$0xf]
    %v26 = vld [vmem:[%s0 + $0x28] sm:$0xf]
    %v27 = vld [vmem:[%s0 + $0x2c] sm:$0xf]
    %v28 = vld [vmem:[%s0 + $0x30] sm:$0xf]
    %v29 = vld [vmem:[%s0 + $0x34] sm:$0xf]
    %v30 = vld [vmem:[%s0 + $0x38] sm:$0xf]
    %v31 = vld [vmem:[%s0 + $0x3c] sm:$0xf]
    %v32 = vld [vmem:[%s0 + $0x40] sm:$0xf]
    %v33 = vld [vmem:[%s0 + $0x44] sm:$0xf]
    %v34 = vld [vmem:[%s0 + $0x48] sm:$0xf]
    %v35 = vld [vmem:[%s0 + $0x4c] sm:$0xf]
    %v36 = vld [vmem:[%s0 + $0x50] sm:$0xf]
    %v37 = vld [vmem:[%s0 + $0x54] sm:$0xf]
    %v38 = vld [vmem:[%s0 + $0x58] sm:$0xf]
    %v39 = vld [vmem:[%s0 + $0x5c] sm:$0xf]
    %v40 = vld [vmem:[%s0 + $0x60] sm:$0xf]
    %v41 = vld [vmem:[%s0 + $0x64] sm:$0xf]
    %v42 = vld [vmem:[%s0 + $0x68] sm:$0xf]
    %v43 = vld [vmem:[%s0 + $0x6c] sm:$0xf]
    %v44 = vld [vmem:[%s0 + $0x70] sm:$0xf]
    %v45 = vld [vmem:[%s0 + $0x74] sm:$0xf]
    %v46 = vld [vmem:[%s0 + $0x78] sm:$0xf]
    %v47 = vld [vmem:[%s0 + $0x7c] sm:$0xf]
    %v48 = vld [vmem:[%s1] sm:$0xf]
    %v49 = vld [vmem:[%s1 + $0x4] sm:$0xf]
    %v50 = vld [vmem:[%s1 + $0x8] sm:$0xf]
    %v51 = vld [vmem:[%s1 + $0xc] sm:$0xf]
    %v52 = vld [vmem:[%s1 + $0x10] sm:$0x3]
    %v85 = vunpack.c.l.b16 %v16
    %v86 = vunpack.c.l.b16 %v17
    %v87 = vunpack.c.l.b16 %v18
    %v88 = vunpack.c.l.b16 %v19
    %v89 = vunpack.c.l.b16 %v20
    %v90 = vunpack.c.l.b16 %v21
    %v91 = vunpack.c.l.b16 %v22
    %v92 = vunpack.c.l.b16 %v23
    %v93 = vunpack.c.l.b16 %v24
    %v94 = vunpack.c.l.b16 %v25
    %v95 = vunpack.c.l.b16 %v26
    %v96 = vunpack.c.l.b16 %v27
    %v97 = vunpack.c.l.b16 %v28
    %v98 = vunpack.c.l.b16 %v29
    %v99 = vunpack.c.l.b16 %v30
    %v100 = vunpack.c.l.b16 %v31
    %v101 = vunpack.c.l.b16 %v32
    %v102 = vunpack.c.l.b16 %v33
    %v103 = vunpack.c.l.b16 %v34
    %v104 = vunpack.c.l.b16 %v35
    %v105 = vunpack.c.l.b16 %v36
    %v106 = vunpack.c.l.b16 %v37
    %v107 = vunpack.c.l.b16 %v38
    %v108 = vunpack.c.l.b16 %v39
    %v109 = vunpack.c.l.b16 %v40
    %v110 = vunpack.c.l.b16 %v41
    %v111 = vunpack.c.l.b16 %v42
    %v112 = vunpack.c.l.b16 %v43
    %v113 = vunpack.c.l.b16 %v44
    %v114 = vunpack.c.l.b16 %v45
    %v115 = vunpack.c.l.b16 %v46
    %v116 = vunpack.c.l.b16 %v47
    %v117 = vpack.c.b16 %v86, %v85
    %v118 = vpack.c.b16 %v88, %v87
    %v119 = vpack.c.b16 %v90, %v89
    %v120 = vpack.c.b16 %v92, %v91
    %v121 = vpack.c.b16 %v94, %v93
    %v122 = vpack.c.b16 %v96, %v95
    %v123 = vpack.c.b16 %v98, %v97
    %v124 = vpack.c.b16 %v100, %v99
    %v125 = vpack.c.b16 %v102, %v101
    %v126 = vpack.c.b16 %v104, %v103
    %v127 = vpack.c.b16 %v106, %v105
    %v128 = vpack.c.b16 %v108, %v107
    %v129 = vpack.c.b16 %v110, %v109
    %v130 = vpack.c.b16 %v112, %v111
    %v131 = vpack.c.b16 %v114, %v113
    %v132 = vpack.c.b16 %v116, %v115
    %v138 = vunpack.c.l.b16 %v48
    %v139 = vunpack.c.l.b16 %v49
    %v140 = vunpack.c.l.b16 %v50
    %v141 = vunpack.c.l.b16 %v51
    %v142 = vunpack.c.l.b16 %v52
    %v143 = vpack.c.b16 %v139, %v138
    %v144 = vpack.c.b16 %v141, %v140
    %v145 = vpack.c.b16 %v142, %v142
    %vm148 = vcmask 293888
    %v150 = vsel %vm148, %v117, 0
    %v153 = vsel %vm148, %v118, 0
    %v156 = vsel %vm148, %v119, 0
    %v159 = vsel %vm148, %v120, 0
    %v162 = vsel %vm148, %v121, 0
    %v165 = vsel %vm148, %v122, 0
    %v168 = vsel %vm148, %v123, 0
    %v171 = vsel %vm148, %v124, 0
    %v174 = vsel %vm148, %v125, 0
    %v177 = vsel %vm148, %v126, 0
    %v180 = vsel %vm148, %v127, 0
    %v183 = vsel %vm148, %v128, 0
    %v186 = vsel %vm148, %v129, 0
    %v189 = vsel %vm148, %v130, 0
    %v192 = vsel %vm148, %v131, 0
    %v195 = vsel %vm148, %v132, 0
    %vm197 = vcmask 1041408
    %v199 = vsel %vm197, %v145, 0
    %201 = vmatprep.subr.bf16.mxu0 0
    %202 = vmatpush1.bf16.msra.mxu0 %v143
    %203 = vmatprep.subr.bf16.mxu0 0
    %204 = vmatpush1.bf16.msra.mxu0 %v144
    %205 = vmatprep.subr.bf16.mxu0 0
    %206 = vmatpush1.bf16.msra.mxu0 %v199
    %207 = vmatprep.subr.bf16.mxu0 0
    %208 = vmatpush1.bf16.msra.mxu0 0
    %209 = vmatprep.subr.bf16.mxu0 0
    %210 = vmatpush1.bf16.msra.mxu0 0
    %211 = vmatprep.subr.bf16.mxu0 0
    %212 = vmatpush1.bf16.msra.mxu0 0
    %213 = vmatprep.subr.bf16.mxu0 0
    %214 = vmatpush1.bf16.msra.mxu0 0
    %215 = vmatprep.subr.bf16.mxu0 0
    %216 = vmatpush1.bf16.msra.mxu0 0
    %217 = vmatprep.subr.bf16.mxu0 0
    %218 = vmatpush1.bf16.msra.mxu0 0
    %219 = vmatprep.subr.bf16.mxu0 0
    %220 = vmatpush1.bf16.msra.mxu0 0
    %221 = vmatprep.subr.bf16.mxu0 0
    %222 = vmatpush1.bf16.msra.mxu0 0
    %223 = vmatprep.subr.bf16.mxu0 0
    %224 = vmatpush1.bf16.msra.mxu0 0
    %225 = vmatprep.subr.bf16.mxu0 0
    %226 = vmatpush1.bf16.msra.mxu0 0
    %227 = vmatprep.subr.bf16.mxu0 0
    %228 = vmatpush1.bf16.msra.mxu0 0
    %229 = vmatprep.subr.bf16.mxu0 0
    %230 = vmatpush1.bf16.msra.mxu0 0
    %231 = vmatprep.subr.bf16.mxu0 0
    %232 = vmatpush1.bf16.msra.mxu0 0
    %233 = vmatprep.mubr.bf16.mxu0 0
    %234 = vmatmul.mubr.bf16.gmra.mrb[0].mxu0 %v150
    %v235 = vpop.f32.mrb[0].mxu0
    %v236 = vadd.f32 0.0, %v235
    %v237 = vpop.f32.mrb[0].mxu0
    %v238 = vpop.f32.mrb[0].mxu0
    %v239 = vadd.f32 0.0, %v238
    %v240 = vpop.f32.mrb[0].mxu0
    %241 = vmatprep.mubr.bf16.mxu0 0
    %242 = vmatmul.mubr.bf16.gmra.mrb[0].mxu0 %v153
    %v243 = vpop.f32.mrb[0].mxu0
    %v244 = vadd.f32 0.0, %v243
    %v245 = vpop.f32.mrb[0].mxu0
    %v246 = vpop.f32.mrb[0].mxu0
    %v247 = vadd.f32 0.0, %v246
    %v248 = vpop.f32.mrb[0].mxu0
    %249 = vmatprep.mubr.bf16.mxu0 0
    %250 = vmatmul.mubr.bf16.gmra.mrb[0].mxu0 %v156
    %v251 = vpop.f32.mrb[0].mxu0
    %v252 = vadd.f32 0.0, %v251
    %v253 = vpop.f32.mrb[0].mxu0
    %v254 = vpop.f32.mrb[0].mxu0
    %v255 = vadd.f32 0.0, %v254
    %v256 = vpop.f32.mrb[0].mxu0
    %257 = vmatprep.mubr.bf16.mxu0 0
    %258 = vmatmul.mubr.bf16.gmra.mrb[0].mxu0 %v159
    %v259 = vpop.f32.mrb[0].mxu0
    %v260 = vadd.f32 0.0, %v259
    %v261 = vpop.f32.mrb[0].mxu0
    %v262 = vpop.f32.mrb[0].mxu0
    %v263 = vadd.f32 0.0, %v262
    %v264 = vpop.f32.mrb[0].mxu0
    %265 = vmatprep.mubr.bf16.mxu0 0
    %266 = vmatmul.mubr.bf16.gmra.mrb[0].mxu0 %v162
    %v267 = vpop.f32.mrb[0].mxu0
    %v268 = vadd.f32 0.0, %v267
    %v269 = vpop.f32.mrb[0].mxu0
    %v270 = vpop.f32.mrb[0].mxu0
    %v271 = vadd.f32 0.0, %v270
    %v272 = vpop.f32.mrb[0].mxu0
    %273 = vmatprep.mubr.bf16.mxu0 0
    %274 = vmatmul.mubr.bf16.gmra.mrb[0].mxu0 %v165
    %v275 = vpop.f32.mrb[0].mxu0
    %v276 = vadd.f32 0.0, %v275
    %v277 = vpop.f32.mrb[0].mxu0
    %v278 = vpop.f32.mrb[0].mxu0
    %v279 = vadd.f32 0.0, %v278
    %v280 = vpop.f32.mrb[0].mxu0
    %281 = vmatprep.mubr.bf16.mxu0 0
    %282 = vmatmul.mubr.bf16.gmra.mrb[0].mxu0 %v168
    %v283 = vpop.f32.mrb[0].mxu0
    %v284 = vadd.f32 0.0, %v283
    %v285 = vpop.f32.mrb[0].mxu0
    %v286 = vpop.f32.mrb[0].mxu0
    %v287 = vadd.f32 0.0, %v286
    %v288 = vpop.f32.mrb[0].mxu0
    %289 = vmatprep.mubr.bf16.mxu0 0
    %290 = vmatmul.mubr.bf16.gmra.mrb[0].mxu0 %v171
    %v291 = vpop.f32.mrb[0].mxu0
    %v292 = vadd.f32 0.0, %v291
    %v293 = vpop.f32.mrb[0].mxu0
    %v294 = vpop.f32.mrb[0].mxu0
    %v295 = vadd.f32 0.0, %v294
    %v296 = vpop.f32.mrb[0].mxu0
    %297 = vmatprep.mubr.bf16.mxu0 0
    %298 = vmatmul.mubr.bf16.gmra.mrb[0].mxu0 %v174
    %v299 = vpop.f32.mrb[0].mxu0
    %v300 = vadd.f32 0.0, %v299
    %v301 = vpop.f32.mrb[0].mxu0
    %v302 = vpop.f32.mrb[0].mxu0
    %v303 = vadd.f32 0.0, %v302
    %v304 = vpop.f32.mrb[0].mxu0
    %305 = vmatprep.mubr.bf16.mxu0 0
    %306 = vmatmul.mubr.bf16.gmra.mrb[0].mxu0 %v177
    %v307 = vpop.f32.mrb[0].mxu0
    %v308 = vadd.f32 0.0, %v307
    %v309 = vpop.f32.mrb[0].mxu0
    %v310 = vpop.f32.mrb[0].mxu0
    %v311 = vadd.f32 0.0, %v310
    %v312 = vpop.f32.mrb[0].mxu0
    %313 = vmatprep.mubr.bf16.mxu0 0
    %314 = vmatmul.mubr.bf16.gmra.mrb[0].mxu0 %v180
    %v315 = vpop.f32.mrb[0].mxu0
    %v316 = vadd.f32 0.0, %v315
    %v317 = vpop.f32.mrb[0].mxu0
    %v318 = vpop.f32.mrb[0].mxu0
    %v319 = vadd.f32 0.0, %v318
    %v320 = vpop.f32.mrb[0].mxu0
    %321 = vmatprep.mubr.bf16.mxu0 0
    %322 = vmatmul.mubr.bf16.gmra.mrb[0].mxu0 %v183
    %v323 = vpop.f32.mrb[0].mxu0
    %v324 = vadd.f32 0.0, %v323
    %v325 = vpop.f32.mrb[0].mxu0
    %v326 = vpop.f32.mrb[0].mxu0
    %v327 = vadd.f32 0.0, %v326
    %v328 = vpop.f32.mrb[0].mxu0
    %329 = vmatprep.mubr.bf16.mxu0 0
    %330 = vmatmul.mubr.bf16.gmra.mrb[0].mxu0 %v186
    %v331 = vpop.f32.mrb[0].mxu0
    %v332 = vadd.f32 0.0, %v331
    %v333 = vpop.f32.mrb[0].mxu0
    %v334 = vpop.f32.mrb[0].mxu0
    %v335 = vadd.f32 0.0, %v334
    %v336 = vpop.f32.mrb[0].mxu0
    %337 = vmatprep.mubr.bf16.mxu0 0
    %338 = vmatmul.mubr.bf16.gmra.mrb[0].mxu0 %v189
    %v339 = vpop.f32.mrb[0].mxu0
    %v340 = vadd.f32 0.0, %v339
    %v341 = vpop.f32.mrb[0].mxu0
    %v342 = vpop.f32.mrb[0].mxu0
    %v343 = vadd.f32 0.0, %v342
    %v344 = vpop.f32.mrb[0].mxu0
    %345 = vmatprep.mubr.bf16.mxu0 0
    %346 = vmatmul.mubr.bf16.gmra.mrb[0].mxu0 %v192
    %v347 = vpop.f32.mrb[0].mxu0
    %v348 = vadd.f32 0.0, %v347
    %v349 = vpop.f32.mrb[0].mxu0
    %v350 = vpop.f32.mrb[0].mxu0
    %v351 = vadd.f32 0.0, %v350
    %v352 = vpop.f32.mrb[0].mxu0
    %353 = vmatprep.mubr.bf16.mxu0 0
    %354 = vmatmul.mubr.bf16.gmra.mrb[0].mxu0 %v195
    %v355 = vpop.f32.mrb[0].mxu0
    %v356 = vadd.f32 0.0, %v355
    %v357 = vpop.f32.mrb[0].mxu0
    %v358 = vpop.f32.mrb[0].mxu0
    %v359 = vadd.f32 0.0, %v358
    %v360 = vpop.f32.mrb[0].mxu0
    %361 = vdwg.mxu0
    %362 = vst [vmem:[#allocation2] sm:$0xff] %v236
    %363 = vst [vmem:[#allocation2 + $0x8] sm:$0xff] %v239
    %364 = vst [vmem:[#allocation2 + $0x10] sm:$0xff] %v244
    %365 = vst [vmem:[#allocation2 + $0x18] sm:$0xff] %v247
    %366 = vst [vmem:[#allocation2 + $0x20] sm:$0xff] %v252
    %367 = vst [vmem:[#allocation2 + $0x28] sm:$0xff] %v255
    %368 = vst [vmem:[#allocation2 + $0x30] sm:$0xff] %v260
    %369 = vst [vmem:[#allocation2 + $0x38] sm:$0xff] %v263
    %370 = vst [vmem:[#allocation2 + $0x40] sm:$0xff] %v268
    %371 = vst [vmem:[#allocation2 + $0x48] sm:$0xff] %v271
    %372 = vst [vmem:[#allocation2 + $0x50] sm:$0xff] %v276
    %373 = vst [vmem:[#allocation2 + $0x58] sm:$0xff] %v279
    %374 = vst [vmem:[#allocation2 + $0x60] sm:$0xff] %v284
    %375 = vst [vmem:[#allocation2 + $0x68] sm:$0xff] %v287
    %376 = vst [vmem:[#allocation2 + $0x70] sm:$0xff] %v292
    %377 = vst [vmem:[#allocation2 + $0x78] sm:$0xff] %v295
    %378 = vst [vmem:[#allocation2 + $0x80] sm:$0xff] %v300
    %379 = vst [vmem:[#allocation2 + $0x88] sm:$0xff] %v303
    %380 = vst [vmem:[#allocation2 + $0x90] sm:$0xff] %v308
    %381 = vst [vmem:[#allocation2 + $0x98] sm:$0xff] %v311
    %382 = vst [vmem:[#allocation2 + $0xa0] sm:$0xff] %v316
    %383 = vst [vmem:[#allocation2 + $0xa8] sm:$0xff] %v319
    %384 = vst [vmem:[#allocation2 + $0xb0] sm:$0xff] %v324
    %385 = vst [vmem:[#allocation2 + $0xb8] sm:$0xff] %v327
    %386 = vst [vmem:[#allocation2 + $0xc0] sm:$0xff] %v332
    %387 = vst [vmem:[#allocation2 + $0xc8] sm:$0xff] %v335
    %388 = vst [vmem:[#allocation2 + $0xd0] sm:$0xff] %v340
    %389 = vst [vmem:[#allocation2 + $0xd8] sm:$0xff] %v343
    %390 = vst [vmem:[#allocation2 + $0xe0] sm:$0xff] %v348
    %391 = vst [vmem:[#allocation2 + $0xe8] sm:$0xff] %v351
    %392 = vst [vmem:[#allocation2 + $0xf0] sm:$0xff] %v356
    %393 = vst [vmem:[#allocation2 + $0xf8] sm:$0xff] %v359
    %v394 = vadd.f32 %v236, %v239
    %v395 = vadd.f32 %v394, %v244
    %v396 = vadd.f32 %v395, %v247
    %v397 = vadd.f32 %v396, %v252
    %v398 = vadd.f32 %v397, %v255
    %v399 = vadd.f32 %v398, %v260
    %v400 = vadd.f32 %v399, %v263
    %v401 = vadd.f32 %v400, %v268
    %v402 = vadd.f32 %v401, %v271
    %v403 = vadd.f32 %v402, %v276
    %v404 = vadd.f32 %v403, %v279
    %v405 = vadd.f32 %v404, %v284
    %v406 = vadd.f32 %v405, %v287
    %v407 = vadd.f32 %v406, %v292
    %v408 = vadd.f32 %v407, %v295
    %v409 = vadd.f32 %v408, %v300
    %v410 = vadd.f32 %v409, %v303
    %v411 = vadd.f32 %v410, %v308
    %v412 = vadd.f32 %v411, %v311
    %v413 = vadd.f32 %v412, %v316
    %v414 = vadd.f32 %v413, %v319
    %v415 = vadd.f32 %v414, %v324
    %v416 = vadd.f32 %v415, %v327
    %v417 = vadd.f32 %v416, %v332
    %v418 = vadd.f32 %v417, %v335
    %v419 = vadd.f32 %v418, %v340
    %v420 = vadd.f32 %v419, %v343
    %v421 = vadd.f32 %v420, %v348
    %v422 = vadd.f32 %v421, %v351
    %v423 = vadd.f32 %v422, %v356
    %v424 = vadd.f32 %v423, %v359
    %v425 = vrot.slane %v424, 4
    %v426 = vadd.f32 %v424, %v425
    %v427 = vrot.slane %v426, 2
    %v428 = vadd.f32 %v426, %v427
    %v429 = vrot.slane %v428, 1
    %v430 = vadd.f32 %v428, %v429
    %v431 = vmul.f32 %v236, %v236
    %v432 = vmul.f32 %v239, %v239
    %v433 = vmul.f32 %v244, %v244
    %v434 = vmul.f32 %v247, %v247
    %v435 = vmul.f32 %v252, %v252
    %v436 = vmul.f32 %v255, %v255
    %v437 = vmul.f32 %v260, %v260
    %v438 = vmul.f32 %v263, %v263
    %v439 = vmul.f32 %v268, %v268
    %v440 = vmul.f32 %v271, %v271
    %v441 = vmul.f32 %v276, %v276
    %v442 = vmul.f32 %v279, %v279
    %v443 = vmul.f32 %v284, %v284
    %v444 = vmul.f32 %v287, %v287
    %v445 = vmul.f32 %v292, %v292
    %v446 = vmul.f32 %v295, %v295
    %v447 = vmul.f32 %v300, %v300
    %v448 = vmul.f32 %v303, %v303
    %v449 = vmul.f32 %v308, %v308
    %v450 = vmul.f32 %v311, %v311
    %v451 = vmul.f32 %v316, %v316
    %v452 = vmul.f32 %v319, %v319
    %v453 = vmul.f32 %v324, %v324
    %v454 = vmul.f32 %v327, %v327
    %v455 = vmul.f32 %v332, %v332
    %v456 = vmul.f32 %v335, %v335
    %v457 = vmul.f32 %v340, %v340
    %v458 = vmul.f32 %v343, %v343
    %v459 = vmul.f32 %v348, %v348
    %v460 = vmul.f32 %v351, %v351
    %v461 = vmul.f32 %v356, %v356
    %v462 = vmul.f32 %v359, %v359
    %v463 = vadd.f32 %v431, %v432
    %v464 = vadd.f32 %v463, %v433
    %v465 = vadd.f32 %v464, %v434
    %v466 = vadd.f32 %v465, %v435
    %v467 = vadd.f32 %v466, %v436
    %v468 = vadd.f32 %v467, %v437
    %v469 = vadd.f32 %v468, %v438
    %v470 = vadd.f32 %v469, %v439
    %v471 = vadd.f32 %v470, %v440
    %v472 = vadd.f32 %v471, %v441
    %v473 = vadd.f32 %v472, %v442
    %v474 = vadd.f32 %v473, %v443
    %v475 = vadd.f32 %v474, %v444
    %v476 = vadd.f32 %v475, %v445
    %v477 = vadd.f32 %v476, %v446
    %v478 = vadd.f32 %v477, %v447
    %v479 = vadd.f32 %v478, %v448
    %v480 = vadd.f32 %v479, %v449
    %v481 = vadd.f32 %v480, %v450
    %v482 = vadd.f32 %v481, %v451
    %v483 = vadd.f32 %v482, %v452
    %v484 = vadd.f32 %v483, %v453
    %v485 = vadd.f32 %v484, %v454
    %v486 = vadd.f32 %v485, %v455
    %v487 = vadd.f32 %v486, %v456
    %v488 = vadd.f32 %v487, %v457
    %v489 = vadd.f32 %v488, %v458
    %v490 = vadd.f32 %v489, %v459
    %v491 = vadd.f32 %v490, %v460
    %v492 = vadd.f32 %v491, %v461
    %v493 = vadd.f32 %v492, %v462
    %v494 = vrot.slane %v493, 4
    %v495 = vadd.f32 %v493, %v494
    %v496 = vrot.slane %v495, 2
    %v497 = vadd.f32 %v495, %v496
    %v498 = vrot.slane %v497, 1
    %v499 = vadd.f32 %v497, %v498
    %vm500 = vcmask 1040384
    %v501 = vsel %vm500, %v430, %v499
    %502 = vst [vmem:[#allocation4] sm:$0x3] %v501
    // Predicated region
    $region10: #{tpu_custom_call.1} parent=1 // pred_check
      _
    $region11: #{tpu_custom_call.1} parent=1 // pred_check_branch
      %504 = sbr.rel (0) target = $region13
    $region12: #{tpu_custom_call.1} parent=1 // pred_region
      %s506 = ssub.s32 4096, 4096
      %507 = vsyncadd [#allocation3], %s506
      %s508 = sshll.u32 [#allocation2], 4
      %s509 = int_to_ptr.vmem [resolvable:$true] %s508
      %514 = dma.vmem_to_hbm [thread:$0]  %s509, 4096, %s2, [#allocation3], 128, 128, 8
    $region13: #{tpu_custom_call.1} parent=1 // pred_fallthru
      _
    // Predicated region
    $region14: #{tpu_custom_call.1} parent=1 // pred_check
      _
    $region15: #{tpu_custom_call.1} parent=1 // pred_check_branch
      %516 = sbr.rel (0) target = $region17
    $region16: #{tpu_custom_call.1} parent=1 // pred_region
      %s518 = ssub.s32 32, 32
      %519 = vsyncadd [#allocation5], %s518
      %s521 = sshll.u32 [#allocation4], 4
      %s522 = int_to_ptr.vmem [resolvable:$true] %s521
      %524 = dma.vmem_to_hbm [thread:$0]  %s522, 32, %s3, [#allocation5]
    $region17: #{tpu_custom_call.1} parent=1 // pred_fallthru
      _
    // Predicated region
    $region18: #{tpu_custom_call.1} parent=1 // pred_check
      _
    $region19: #{tpu_custom_call.1} parent=1 // pred_check_branch
      %526 = sbr.rel (0) target = $region21
    $region20: #{tpu_custom_call.1} parent=1 // pred_region
      %527 = dma.done [#allocation3], 4096
    $region21: #{tpu_custom_call.1} parent=1 // pred_fallthru
      _
    // Predicated region
    $region22: #{tpu_custom_call.1} parent=1 // pred_check
      _
    $region23: #{tpu_custom_call.1} parent=1 // pred_check_branch
      %529 = sbr.rel (0) target = $region25
    $region24: #{tpu_custom_call.1} parent=1 // pred_region
      %530 = dma.done [#allocation5], 32
    $region25: #{tpu_custom_call.1} parent=1 // pred_fallthru
      _
    %531 = vsyncpa [#allocation3], 1
    %532 = vsyncpa [#allocation5], 1

</llo_original>
